<compile_context>
chip_gen: v7x
topology: tpu7x:2x2x1
jax: 0.10.0
libtpu: 0.0.40
codegen_flags: <defaults>
</compile_context>

<pallas_src>
import jax
import jax.numpy as jnp
from jax.experimental import pallas as pl
from jax.experimental.pallas import tpu as pltpu

_MAX_CHUNKS = 4  # outstanding HBM->HBM DMAs (2-4 is enough to saturate HBM BW)


def _lane_dense_layout(n: int):
    """Pick a lane-dense (rows, cols) factorization of n (cols a multiple of 128)."""
    for c in (4096, 2048, 1024, 512, 256, 128):
        if n % c == 0:
            return n // c, c
    return None


def _sublane_multiple(dtype) -> int:
    """Native sublane multiple: 8 for 32-bit, 16 for 16-bit, 32 for 8-bit dtypes."""
    itemsize = max(1, jnp.dtype(dtype).itemsize)
    return max(8, 32 // itemsize)


def _chunk_rows(total_rows: int, sub: int, max_chunks: int):
    """Split rows into <= max_chunks contiguous chunks with sublane-aligned starts."""
    if total_rows <= sub:
        return [(0, total_rows)]
    n_chunks = min(max_chunks, (total_rows + sub - 1) // sub)
    per = (total_rows + n_chunks - 1) // n_chunks   # ceil(rows / n_chunks)
    per = ((per + sub - 1) // sub) * sub            # round up to sublane multiple
    chunks = []
    start = 0
    while start < total_rows:
        rows = min(per, total_rows - start)
        chunks.append((start, rows))
        start += rows
    return chunks


def _make_dma_copy_kernel(chunks, full_rows):
    """Kernel: chunked HBM->HBM DMA copy (no VMEM staging, no TensorCore work)."""

    def kernel(x_hbm, o_hbm, sems):
        copies = []
        for idx, (start, rows) in enumerate(chunks):
            if start == 0 and rows == full_rows:
                src, dst = x_hbm, o_hbm               # whole-ref copy
            else:
                src = x_hbm.at[pl.ds(start, rows), :]
                dst = o_hbm.at[pl.ds(start, rows), :]
            cp = pltpu.make_async_copy(src, dst, sems.at[idx])
            cp.start()
            copies.append(cp)
        for cp in copies:                             # all chunks in flight, then wait
            cp.wait()

    return kernel


def _copy_2d(x2: jax.Array) -> jax.Array:
    """HBM->HBM DMA copy of a lane-dense 2D array."""
    R, C = x2.shape
    sub = _sublane_multiple(x2.dtype)
    chunks = _chunk_rows(R, sub, _MAX_CHUNKS)
    nbytes = R * C * jnp.dtype(x2.dtype).itemsize

    return pl.pallas_call(
        _make_dma_copy_kernel(chunks, R),
        out_shape=jax.ShapeDtypeStruct((R, C), x2.dtype),
        in_specs=[pl.BlockSpec(memory_space=pl.ANY)],   # raw HBM ref, no auto-DMA
        out_specs=pl.BlockSpec(memory_space=pl.ANY),
        scratch_shapes=[pltpu.SemaphoreType.DMA((len(chunks),))],
        cost_estimate=pl.CostEstimate(
            flops=0, transcendentals=0, bytes_accessed=2 * nbytes),
    )(x2)


def identity(x: jax.Array) -> jax.Array:
    """Identity forward pass: returns a tensor equal to x (same shape, dtype, values)."""
    orig_shape = x.shape
    n = x.size

    if n == 0:
        # Zero-size tensor: nothing to copy.
        return x

    layout = _lane_dense_layout(n)
    if layout is not None:
        R, C = layout
        return _copy_2d(x.reshape(R, C)).reshape(orig_shape)

    # Element count not a multiple of 128: pad the flat array up to a multiple
    # of 8*128, run the same HBM->HBM DMA path, then slice back. Robust for any
    # size (no whole-array VMEM block), at the cost of the pad/slice traffic.
    n_pad = ((n + 1023) // 1024) * 1024
    flat = jnp.pad(x.reshape(-1), (0, n_pad - n))
    out2 = _copy_2d(flat.reshape(n_pad // 128, 128))
    return out2.reshape(-1)[:n].reshape(orig_shape)


if __name__ == "__main__":
    key = jax.random.PRNGKey(0)
    # Small NCHW input consistent with a vision-style module.
    x = jax.random.normal(key, (2, 4, 16, 16), dtype=jnp.float32)

    y = identity(x)
    jax.block_until_ready(y)

    assert y.shape == x.shape, f"shape mismatch: {y.shape} vs {x.shape}"
    assert y.dtype == x.dtype, f"dtype mismatch: {y.dtype} vs {x.dtype}"
    assert bool(jnp.all(y == x)), "values mismatch: identity kernel altered data"

    print("KERNEL_OK")
</pallas_src>

<mosaic_0001>
module attributes {stable_mosaic.version = 11 : i64} {
  func.func @kernel(%arg0: memref<1x2048xf32, #tpu.memory_space<any>>, %arg1: memref<1x2048xf32, #tpu.memory_space<any>>, %arg2: memref<1x!tpu.dma_semaphore, #tpu.memory_space<semaphore_mem>>) attributes {dimension_semantics = [], scalar_prefetch = 0 : i64, scratch_operands = 1 : i64, tpu.core_type = #tpu.core_type<tc>} {
    %c0_i32 = arith.constant 0 : i32
    %0 = tpu.memref_slice %arg2[%c0_i32] : memref<1x!tpu.dma_semaphore, #tpu.memory_space<semaphore_mem>> -> memref<1x!tpu.dma_semaphore, #tpu.memory_space<semaphore_mem>>
    %1 = tpu.memref_squeeze %0 : memref<1x!tpu.dma_semaphore, #tpu.memory_space<semaphore_mem>> -> memref<!tpu.dma_semaphore, #tpu.memory_space<semaphore_mem>>
    tpu.enqueue_dma source(%arg0 : memref<1x2048xf32, #tpu.memory_space<any>>) target(%arg1 : memref<1x2048xf32, #tpu.memory_space<any>>) target_semaphore(%1 : memref<!tpu.dma_semaphore, #tpu.memory_space<semaphore_mem>>)
    %c0_i32_0 = arith.constant 0 : i32
    %2 = tpu.memref_slice %arg2[%c0_i32_0] : memref<1x!tpu.dma_semaphore, #tpu.memory_space<semaphore_mem>> -> memref<1x!tpu.dma_semaphore, #tpu.memory_space<semaphore_mem>>
    %3 = tpu.memref_squeeze %2 : memref<1x!tpu.dma_semaphore, #tpu.memory_space<semaphore_mem>> -> memref<!tpu.dma_semaphore, #tpu.memory_space<semaphore_mem>>
    tpu.wait_dma2 semaphore(%3 : memref<!tpu.dma_semaphore, #tpu.memory_space<semaphore_mem>>) src(%arg0 : memref<1x2048xf32, #tpu.memory_space<any>>) dst(%arg1 : memref<1x2048xf32, #tpu.memory_space<any>>)
    return
  }
}

</mosaic_0001>

<llo_original>
// kernel: tpu_custom_call.1
$region0: #{tpu_custom_call.1}
  #allocation0 [shape = 'u32[]', space=smem, size = 0x4, offset = 0x4, fixed_abs, tag = 'smem constant byte address 0x4 - core index']
  #allocation1 [shape = 'u32[144,128]{1,0:T(1,128)}', space=vmem, size = 0x12000, scoped, tag = 'internal scratch']
  #allocation2 [shape = 's32[1]{0}', space=sflag, size = 0x4, scoped, tag = 'scratch operand']
  #allocation3 [shape = 's32[]', space=sflag, size = 0x4, offset = 0, fixed_abs, tag = 'sflag constant byte address 0x0 - dummy sync flag']
  #allocation4 [shape = 'u32[0]{0}', space=smem, size = 0, offset = 0, fixed_abs, tag = 'smem constant byte address 0x0 - null']
  %s0 = inlined_call_operand.hbm [shape: f32[1,2048], index: 0, kind: input, shape index: {}]
  %s1 = inlined_call_operand.hbm [shape: f32[1,2048], index: 1, kind: output, shape index: {}]
  %s2 = sld [smem:[#allocation0]]
  $region2: #{tpu_custom_call.1} parent=0
    _
  %s4 = ssub.s32 1, %s2
  %s5 = scalar_select 0, %s4, %s2
  %s7 = sshll.u32 1, 14
  %s8 = sxor.u32 4294967295, %s7
  %s11 = sshll.u32 3, 24
  %s12 = sxor.u32 4294967295, %s11
  %s13 = sand.u32 0, %s12
  %s15 = sor.u32 %s13, 0
  %18 = dma.general %s0, 256, %s1, [#allocation2], [#allocation3], [#allocation4], %s15, 0
  %s19 = smul.u32 1, 16
  %s20 = sshll.u32 %s19, 4
  %21 = dma.done [#allocation2], %s20
  %22 = vsyncmov [#allocation2]
  %s23 = vpop.sfrf %22
  %p24 = scmp.eq.s32.totalorder %s23, 0
  %p25 = pneg %p24
  %27 = shalt.err (%p25)

</llo_original>
